<compile_context>
chip_gen: v7x
topology: tpu7x:2x2x1
jax: 0.10.0
libtpu: 0.0.40
codegen_flags: <defaults>
</compile_context>

<pallas_src>
import jax
import jax.numpy as jnp
from jax.experimental import pallas as pl
from jax.experimental.pallas import tpu as pltpu


def _bs_loss_kernel(pred_ref, a_ref, out_ref, pad_ref):
    # pred_ref: (B, 2, h, w)        a_ref: (B, 7, h, w)
    # out_ref:  (1, 1) f32 partial  pad_ref: (B, 2, h+2, w+2) f32 VMEM scratch
    B = pred_ref.shape[0]
    h = pred_ref.shape[2]
    w = pred_ref.shape[3]

    # Zero-pad this block of pred into the scratch (border rows/cols stay 0).
    pad_ref[...] = jnp.zeros_like(pad_ref)
    pad_ref[:, :, 1:h + 1, 1:w + 1] = pred_ref[...].astype(jnp.float32)

    bx = jnp.zeros((B, h, w), jnp.float32)
    by = jnp.zeros((B, h, w), jnp.float32)
    # unfold taps k = 1..7 (the "1:-1" slice over the 9 kernel positions)
    for q in range(7):
        k = q + 1
        ki, kj = k // 3, k % 3
        a_q = a_ref[:, q].astype(jnp.float32)                       # (B, h, w)
        bx = bx + pad_ref[:, 0, ki:ki + h, kj:kj + w] * a_q
        by = by + pad_ref[:, 1, ki:ki + h, kj:kj + w] * a_q

    # bx contributes only columns 1..w-2; by only rows 1..h-2
    s = (jnp.sum(jnp.abs(bx[:, :, 1:w - 1])) +
         jnp.sum(jnp.abs(by[:, 1:h - 1, :])))
    out_ref[...] = s.reshape(1, 1)


@jax.jit
def bs_loss(pred, A):
    """pred: (N, 2, h, w), A: (N, 7, h, w) -> scalar f32 loss."""
    N, C, h, w = pred.shape
    assert C == 2 and A.shape == (N, 7, h, w)
    assert h == w, "torch.stack in the reference requires h == w"
    assert h >= 3 and w >= 3

    # --- choose batch-block size B (v7x-safe: keep pipelined footprint small) ---
    in_bytes_per_batch = (2 * h * w + 7 * h * w) * 4          # pred + A, f32
    scratch_bytes_per_batch = 2 * (h + 2) * (w + 2) * 4       # padded scratch
    per_batch = 2 * in_bytes_per_batch + scratch_bytes_per_batch  # x2 = dbl-buffer
    budget = 40 * 1024 * 1024                                 # ~40 MiB (v7x 64 MiB VMEM)
    B = int(max(1, min(N, min(1024, budget // per_batch))))
    num_blocks = -(-N // B)                                   # cdiv
    Np = num_blocks * B
    if Np != N:
        # zero batch-padding contributes exactly 0 to the |.| sums
        pad_n = Np - N
        pred = jnp.pad(pred, ((0, pad_n), (0, 0), (0, 0), (0, 0)))
        A = jnp.pad(A, ((0, pad_n), (0, 0), (0, 0), (0, 0)))

    vmem_needed = B * per_batch + (1 << 16)
    vmem_limit = int(min(56 * 1024 * 1024,
                         max(32 * 1024 * 1024, int(vmem_needed * 1.25))))

    partials = pl.pallas_call(
        _bs_loss_kernel,
        out_shape=jax.ShapeDtypeStruct((num_blocks, 1), jnp.float32),
        grid_spec=pltpu.PrefetchScalarGridSpec(
            num_scalar_prefetch=0,
            grid=(num_blocks,),
            in_specs=[
                pl.BlockSpec((B, 2, h, w), lambda n: (n, 0, 0, 0)),
                pl.BlockSpec((B, 7, h, w), lambda n: (n, 0, 0, 0)),
            ],
            out_specs=pl.BlockSpec((1, 1), lambda n: (n, 0)),
            scratch_shapes=[pltpu.VMEM((B, 2, h + 2, w + 2), jnp.float32)],
        ),
        compiler_params=pltpu.CompilerParams(
            dimension_semantics=("parallel",),   # per-block partials -> megacore OK
            vmem_limit_bytes=vmem_limit,
        ),
        cost_estimate=pl.CostEstimate(
            flops=30 * h * w * N,
            transcendentals=0,
            bytes_accessed=4 * 9 * h * w * N + 4 * num_blocks,
        ),
    )(pred, A)

    n_total = jnp.float32(2 * N * h * (w - 2))   # true N, not padded Np
    return jnp.sum(partials) / n_total


def bs_loss_ref(pred, A):
    """Pure-JAX reference mirroring the PyTorch module."""
    N, _, h, w = pred.shape
    pad = jnp.pad(pred, ((0, 0), (0, 0), (1, 1), (1, 1)))
    patches = jnp.stack(
        [pad[:, :, ki:ki + h, kj:kj + w] for ki in range(3) for kj in range(3)],
        axis=2,
    )  # (N, 2, 9, h, w)
    x = patches[:, 0]
    y = patches[:, 1]
    bx = jnp.sum(x[:, 1:-1, :, 1:-1] * A[:, :, :, 1:-1], axis=1)
    by = jnp.sum(y[:, 1:-1, 1:-1, :] * A[:, :, 1:-1, :], axis=1)
    b_hat = jnp.stack((bx.reshape(-1), by.reshape(-1)))
    return jnp.mean(jnp.abs(b_hat))


if __name__ == "__main__":
    key = jax.random.PRNGKey(0)
    k1, k2 = jax.random.split(key)
    N, h, w = 2, 16, 16
    pred = jax.random.normal(k1, (N, 2, h, w), dtype=jnp.float32)
    A = jax.random.normal(k2, (N, 7, h, w), dtype=jnp.float32)

    loss = bs_loss(pred, A)
    jax.block_until_ready(loss)

    ref = bs_loss_ref(pred, A)
    assert jnp.allclose(loss, ref, rtol=1e-5, atol=1e-5), (loss, ref)
    print("KERNEL_OK")
</pallas_src>

<mosaic_0001>
module attributes {stable_mosaic.version = 11 : i64} {
  func.func @_bs_loss_kernel(%arg0: i32, %arg1: memref<2x2x16x16xf32, #tpu.memory_space<vmem>>, %arg2: memref<2x7x16x16xf32, #tpu.memory_space<vmem>>, %arg3: memref<1x1xf32, #tpu.memory_space<vmem>>, %arg4: memref<2x2x18x18xf32, #tpu.memory_space<vmem>>) attributes {dimension_semantics = [#tpu.dimension_semantics<parallel>], iteration_bounds = array<i64: 1>, scalar_prefetch = 0 : i64, scratch_operands = 1 : i64, tpu.core_type = #tpu.core_type<tc>, window_params = [{transform_indices = @transform_0, window_bounds = array<i64: 2, 2, 16, 16>}, {transform_indices = @transform_1, window_bounds = array<i64: 2, 7, 16, 16>}, {transform_indices = @transform_2, window_bounds = array<i64: 1, 1>}]} {
    %cst = arith.constant 0.000000e+00 : f32
    %0 = vector.broadcast %cst : f32 to vector<2x2x18x18xf32>
    %c0 = arith.constant 0 : index
    %c0_0 = arith.constant 0 : index
    %c0_1 = arith.constant 0 : index
    %c0_2 = arith.constant 0 : index
    %1 = vector.load %arg4[%c0, %c0_0, %c0_1, %c0_2] : memref<2x2x18x18xf32, #tpu.memory_space<vmem>>, vector<2x2x18x18xf32>
    tpu.vector_store %arg4[%c0, %c0_0, %c0_1, %c0_2], %0 {strides = array<i32>} : memref<2x2x18x18xf32, #tpu.memory_space<vmem>>, vector<2x2x18x18xf32>,
    %c0_3 = arith.constant 0 : index
    %c0_4 = arith.constant 0 : index
    %c0_5 = arith.constant 0 : index
    %c0_6 = arith.constant 0 : index
    %2 = vector.load %arg1[%c0_3, %c0_4, %c0_5, %c0_6] : memref<2x2x16x16xf32, #tpu.memory_space<vmem>>, vector<2x2x16x16xf32>
    %c0_7 = arith.constant 0 : index
    %c0_8 = arith.constant 0 : index
    %c1 = arith.constant 1 : index
    %c1_9 = arith.constant 1 : index
    %3 = vector.load %arg4[%c0_7, %c0_8, %c1, %c1_9] : memref<2x2x18x18xf32, #tpu.memory_space<vmem>>, vector<2x2x16x16xf32>
    tpu.vector_store %arg4[%c0_7, %c0_8, %c1, %c1_9], %2 {strides = array<i32>} : memref<2x2x18x18xf32, #tpu.memory_space<vmem>>, vector<2x2x16x16xf32>,
    %cst_10 = arith.constant 0.000000e+00 : f32
    %4 = vector.broadcast %cst_10 : f32 to vector<2x16x16xf32>
    %cst_11 = arith.constant 0.000000e+00 : f32
    %5 = vector.broadcast %cst_11 : f32 to vector<2x16x16xf32>
    %c0_12 = arith.constant 0 : index
    %c0_13 = arith.constant 0 : index
    %c0_14 = arith.constant 0 : index
    %c0_15 = arith.constant 0 : index
    %6 = vector.load %arg2[%c0_12, %c0_13, %c0_14, %c0_15] : memref<2x7x16x16xf32, #tpu.memory_space<vmem>>, vector<2x1x16x16xf32>
    %7 = vector.shape_cast %6 : vector<2x1x16x16xf32> to vector<2x16x16xf32>
    %c0_16 = arith.constant 0 : index
    %c0_17 = arith.constant 0 : index
    %c0_18 = arith.constant 0 : index
    %c1_19 = arith.constant 1 : index
    %8 = vector.load %arg4[%c0_16, %c0_17, %c0_18, %c1_19] : memref<2x2x18x18xf32, #tpu.memory_space<vmem>>, vector<2x1x16x16xf32>
    %9 = vector.shape_cast %8 : vector<2x1x16x16xf32> to vector<2x16x16xf32>
    %10 = arith.mulf %9, %7 : vector<2x16x16xf32>
    %11 = arith.addf %4, %10 : vector<2x16x16xf32>
    %c0_20 = arith.constant 0 : index
    %c1_21 = arith.constant 1 : index
    %c0_22 = arith.constant 0 : index
    %c1_23 = arith.constant 1 : index
    %12 = vector.load %arg4[%c0_20, %c1_21, %c0_22, %c1_23] : memref<2x2x18x18xf32, #tpu.memory_space<vmem>>, vector<2x1x16x16xf32>
    %13 = vector.shape_cast %12 : vector<2x1x16x16xf32> to vector<2x16x16xf32>
    %14 = arith.mulf %13, %7 : vector<2x16x16xf32>
    %15 = arith.addf %5, %14 : vector<2x16x16xf32>
    %c0_24 = arith.constant 0 : index
    %c1_25 = arith.constant 1 : index
    %c0_26 = arith.constant 0 : index
    %c0_27 = arith.constant 0 : index
    %16 = vector.load %arg2[%c0_24, %c1_25, %c0_26, %c0_27] : memref<2x7x16x16xf32, #tpu.memory_space<vmem>>, vector<2x1x16x16xf32>
    %17 = vector.shape_cast %16 : vector<2x1x16x16xf32> to vector<2x16x16xf32>
    %c0_28 = arith.constant 0 : index
    %c0_29 = arith.constant 0 : index
    %c0_30 = arith.constant 0 : index
    %c2 = arith.constant 2 : index
    %18 = vector.load %arg4[%c0_28, %c0_29, %c0_30, %c2] : memref<2x2x18x18xf32, #tpu.memory_space<vmem>>, vector<2x1x16x16xf32>
    %19 = vector.shape_cast %18 : vector<2x1x16x16xf32> to vector<2x16x16xf32>
    %20 = arith.mulf %19, %17 : vector<2x16x16xf32>
    %21 = arith.addf %11, %20 : vector<2x16x16xf32>
    %c0_31 = arith.constant 0 : index
    %c1_32 = arith.constant 1 : index
    %c0_33 = arith.constant 0 : index
    %c2_34 = arith.constant 2 : index
    %22 = vector.load %arg4[%c0_31, %c1_32, %c0_33, %c2_34] : memref<2x2x18x18xf32, #tpu.memory_space<vmem>>, vector<2x1x16x16xf32>
    %23 = vector.shape_cast %22 : vector<2x1x16x16xf32> to vector<2x16x16xf32>
    %24 = arith.mulf %23, %17 : vector<2x16x16xf32>
    %25 = arith.addf %15, %24 : vector<2x16x16xf32>
    %c0_35 = arith.constant 0 : index
    %c2_36 = arith.constant 2 : index
    %c0_37 = arith.constant 0 : index
    %c0_38 = arith.constant 0 : index
    %26 = vector.load %arg2[%c0_35, %c2_36, %c0_37, %c0_38] : memref<2x7x16x16xf32, #tpu.memory_space<vmem>>, vector<2x1x16x16xf32>
    %27 = vector.shape_cast %26 : vector<2x1x16x16xf32> to vector<2x16x16xf32>
    %c0_39 = arith.constant 0 : index
    %c0_40 = arith.constant 0 : index
    %c1_41 = arith.constant 1 : index
    %c0_42 = arith.constant 0 : index
    %28 = vector.load %arg4[%c0_39, %c0_40, %c1_41, %c0_42] : memref<2x2x18x18xf32, #tpu.memory_space<vmem>>, vector<2x1x16x16xf32>
    %29 = vector.shape_cast %28 : vector<2x1x16x16xf32> to vector<2x16x16xf32>
    %30 = arith.mulf %29, %27 : vector<2x16x16xf32>
    %31 = arith.addf %21, %30 : vector<2x16x16xf32>
    %c0_43 = arith.constant 0 : index
    %c1_44 = arith.constant 1 : index
    %c1_45 = arith.constant 1 : index
    %c0_46 = arith.constant 0 : index
    %32 = vector.load %arg4[%c0_43, %c1_44, %c1_45, %c0_46] : memref<2x2x18x18xf32, #tpu.memory_space<vmem>>, vector<2x1x16x16xf32>
    %33 = vector.shape_cast %32 : vector<2x1x16x16xf32> to vector<2x16x16xf32>
    %34 = arith.mulf %33, %27 : vector<2x16x16xf32>
    %35 = arith.addf %25, %34 : vector<2x16x16xf32>
    %c0_47 = arith.constant 0 : index
    %c3 = arith.constant 3 : index
    %c0_48 = arith.constant 0 : index
    %c0_49 = arith.constant 0 : index
    %36 = vector.load %arg2[%c0_47, %c3, %c0_48, %c0_49] : memref<2x7x16x16xf32, #tpu.memory_space<vmem>>, vector<2x1x16x16xf32>
    %37 = vector.shape_cast %36 : vector<2x1x16x16xf32> to vector<2x16x16xf32>
    %c0_50 = arith.constant 0 : index
    %c0_51 = arith.constant 0 : index
    %c1_52 = arith.constant 1 : index
    %c1_53 = arith.constant 1 : index
    %38 = vector.load %arg4[%c0_50, %c0_51, %c1_52, %c1_53] : memref<2x2x18x18xf32, #tpu.memory_space<vmem>>, vector<2x1x16x16xf32>
    %39 = vector.shape_cast %38 : vector<2x1x16x16xf32> to vector<2x16x16xf32>
    %40 = arith.mulf %39, %37 : vector<2x16x16xf32>
    %41 = arith.addf %31, %40 : vector<2x16x16xf32>
    %c0_54 = arith.constant 0 : index
    %c1_55 = arith.constant 1 : index
    %c1_56 = arith.constant 1 : index
    %c1_57 = arith.constant 1 : index
    %42 = vector.load %arg4[%c0_54, %c1_55, %c1_56, %c1_57] : memref<2x2x18x18xf32, #tpu.memory_space<vmem>>, vector<2x1x16x16xf32>
    %43 = vector.shape_cast %42 : vector<2x1x16x16xf32> to vector<2x16x16xf32>
    %44 = arith.mulf %43, %37 : vector<2x16x16xf32>
    %45 = arith.addf %35, %44 : vector<2x16x16xf32>
    %c0_58 = arith.constant 0 : index
    %c4 = arith.constant 4 : index
    %c0_59 = arith.constant 0 : index
    %c0_60 = arith.constant 0 : index
    %46 = vector.load %arg2[%c0_58, %c4, %c0_59, %c0_60] : memref<2x7x16x16xf32, #tpu.memory_space<vmem>>, vector<2x1x16x16xf32>
    %47 = vector.shape_cast %46 : vector<2x1x16x16xf32> to vector<2x16x16xf32>
    %c0_61 = arith.constant 0 : index
    %c0_62 = arith.constant 0 : index
    %c1_63 = arith.constant 1 : index
    %c2_64 = arith.constant 2 : index
    %48 = vector.load %arg4[%c0_61, %c0_62, %c1_63, %c2_64] : memref<2x2x18x18xf32, #tpu.memory_space<vmem>>, vector<2x1x16x16xf32>
    %49 = vector.shape_cast %48 : vector<2x1x16x16xf32> to vector<2x16x16xf32>
    %50 = arith.mulf %49, %47 : vector<2x16x16xf32>
    %51 = arith.addf %41, %50 : vector<2x16x16xf32>
    %c0_65 = arith.constant 0 : index
    %c1_66 = arith.constant 1 : index
    %c1_67 = arith.constant 1 : index
    %c2_68 = arith.constant 2 : index
    %52 = vector.load %arg4[%c0_65, %c1_66, %c1_67, %c2_68] : memref<2x2x18x18xf32, #tpu.memory_space<vmem>>, vector<2x1x16x16xf32>
    %53 = vector.shape_cast %52 : vector<2x1x16x16xf32> to vector<2x16x16xf32>
    %54 = arith.mulf %53, %47 : vector<2x16x16xf32>
    %55 = arith.addf %45, %54 : vector<2x16x16xf32>
    %c0_69 = arith.constant 0 : index
    %c5 = arith.constant 5 : index
    %c0_70 = arith.constant 0 : index
    %c0_71 = arith.constant 0 : index
    %56 = vector.load %arg2[%c0_69, %c5, %c0_70, %c0_71] : memref<2x7x16x16xf32, #tpu.memory_space<vmem>>, vector<2x1x16x16xf32>
    %57 = vector.shape_cast %56 : vector<2x1x16x16xf32> to vector<2x16x16xf32>
    %c0_72 = arith.constant 0 : index
    %c0_73 = arith.constant 0 : index
    %c2_74 = arith.constant 2 : index
    %c0_75 = arith.constant 0 : index
    %58 = vector.load %arg4[%c0_72, %c0_73, %c2_74, %c0_75] : memref<2x2x18x18xf32, #tpu.memory_space<vmem>>, vector<2x1x16x16xf32>
    %59 = vector.shape_cast %58 : vector<2x1x16x16xf32> to vector<2x16x16xf32>
    %60 = arith.mulf %59, %57 : vector<2x16x16xf32>
    %61 = arith.addf %51, %60 : vector<2x16x16xf32>
    %c0_76 = arith.constant 0 : index
    %c1_77 = arith.constant 1 : index
    %c2_78 = arith.constant 2 : index
    %c0_79 = arith.constant 0 : index
    %62 = vector.load %arg4[%c0_76, %c1_77, %c2_78, %c0_79] : memref<2x2x18x18xf32, #tpu.memory_space<vmem>>, vector<2x1x16x16xf32>
    %63 = vector.shape_cast %62 : vector<2x1x16x16xf32> to vector<2x16x16xf32>
    %64 = arith.mulf %63, %57 : vector<2x16x16xf32>
    %65 = arith.addf %55, %64 : vector<2x16x16xf32>
    %c0_80 = arith.constant 0 : index
    %c6 = arith.constant 6 : index
    %c0_81 = arith.constant 0 : index
    %c0_82 = arith.constant 0 : index
    %66 = vector.load %arg2[%c0_80, %c6, %c0_81, %c0_82] : memref<2x7x16x16xf32, #tpu.memory_space<vmem>>, vector<2x1x16x16xf32>
    %67 = vector.shape_cast %66 : vector<2x1x16x16xf32> to vector<2x16x16xf32>
    %c0_83 = arith.constant 0 : index
    %c0_84 = arith.constant 0 : index
    %c2_85 = arith.constant 2 : index
    %c1_86 = arith.constant 1 : index
    %68 = vector.load %arg4[%c0_83, %c0_84, %c2_85, %c1_86] : memref<2x2x18x18xf32, #tpu.memory_space<vmem>>, vector<2x1x16x16xf32>
    %69 = vector.shape_cast %68 : vector<2x1x16x16xf32> to vector<2x16x16xf32>
    %70 = arith.mulf %69, %67 : vector<2x16x16xf32>
    %71 = arith.addf %61, %70 : vector<2x16x16xf32>
    %c0_87 = arith.constant 0 : index
    %c1_88 = arith.constant 1 : index
    %c2_89 = arith.constant 2 : index
    %c1_90 = arith.constant 1 : index
    %72 = vector.load %arg4[%c0_87, %c1_88, %c2_89, %c1_90] : memref<2x2x18x18xf32, #tpu.memory_space<vmem>>, vector<2x1x16x16xf32>
    %73 = vector.shape_cast %72 : vector<2x1x16x16xf32> to vector<2x16x16xf32>
    %74 = arith.mulf %73, %67 : vector<2x16x16xf32>
    %75 = arith.addf %65, %74 : vector<2x16x16xf32>
    %76 = vector.extract_strided_slice %71 {offsets = [0, 0, 1], sizes = [2, 16, 14], strides = [1, 1, 1]} : vector<2x16x16xf32> to vector<2x16x14xf32>
    %77 = math.absf %76 : vector<2x16x14xf32>
    %78 = vector.shape_cast %77 : vector<2x16x14xf32> to vector<1x2x16x14xf32>
    %cst_91 = arith.constant dense<0.000000e+00> : vector<1xf32>
    %79 = vector.multi_reduction <add>, %78, %cst_91 [1, 2, 3] : vector<1x2x16x14xf32> to vector<1xf32>
    %80 = vector.shape_cast %79 : vector<1xf32> to vector<1x1x1x1xf32>
    %81 = vector.extract %80[0, 0, 0, 0] : f32 from vector<1x1x1x1xf32>
    %82 = vector.extract_strided_slice %75 {offsets = [0, 1, 0], sizes = [2, 14, 16], strides = [1, 1, 1]} : vector<2x16x16xf32> to vector<2x14x16xf32>
    %83 = math.absf %82 : vector<2x14x16xf32>
    %84 = vector.shape_cast %83 : vector<2x14x16xf32> to vector<1x2x14x16xf32>
    %cst_92 = arith.constant dense<0.000000e+00> : vector<1xf32>
    %85 = vector.multi_reduction <add>, %84, %cst_92 [1, 2, 3] : vector<1x2x14x16xf32> to vector<1xf32>
    %86 = vector.shape_cast %85 : vector<1xf32> to vector<1x1x1x1xf32>
    %87 = vector.extract %86[0, 0, 0, 0] : f32 from vector<1x1x1x1xf32>
    %88 = arith.addf %81, %87 : f32
    %89 = vector.broadcast %88 : f32 to vector<1x1xf32>
    %c0_93 = arith.constant 0 : index
    %c0_94 = arith.constant 0 : index
    %90 = vector.load %arg3[%c0_93, %c0_94] : memref<1x1xf32, #tpu.memory_space<vmem>>, vector<1x1xf32>
    tpu.vector_store %arg3[%c0_93, %c0_94], %89 {strides = array<i32>} : memref<1x1xf32, #tpu.memory_space<vmem>>, vector<1x1xf32>,
    return
  }
  func.func @transform_0(%arg0: i32) -> (i32, i32, i32, i32) {
    %c0_i32 = arith.constant 0 : i32
    %c0_i32_0 = arith.constant 0 : i32
    %c0_i32_1 = arith.constant 0 : i32
    %c0_i32_2 = arith.constant 0 : i32
    return %arg0, %c0_i32, %c0_i32_0, %c0_i32_1 : i32, i32, i32, i32
  }
  func.func @transform_1(%arg0: i32) -> (i32, i32, i32, i32) {
    %c0_i32 = arith.constant 0 : i32
    %c0_i32_0 = arith.constant 0 : i32
    %c0_i32_1 = arith.constant 0 : i32
    %c0_i32_2 = arith.constant 0 : i32
    return %arg0, %c0_i32, %c0_i32_0, %c0_i32_1 : i32, i32, i32, i32
  }
  func.func @transform_2(%arg0: i32) -> (i32, i32) {
    %c0_i32 = arith.constant 0 : i32
    %c0_i32_0 = arith.constant 0 : i32
    return %arg0, %c0_i32 : i32, i32
  }
}

</mosaic_0001>

<llo_original>
// kernel: bs_loss.1
$region0: #{bs_loss.1}
  #allocation0 [shape = 'u32[]', space=smem, size = 0x4, offset = 0x4, fixed_abs, tag = 'smem constant byte address 0x4 - core index']
  #allocation1 [shape = 'u32[144,128]{1,0:T(1,128)}', space=vmem, size = 0x12000, scoped, tag = 'internal scratch']
  #allocation2 [shape = 'f32[2,2,18,18]{3,2,1,0:T(8,128)}', space=vmem, size = 0xc000, scoped, tag = 'scratch operand']
  %s0 = inlined_call_operand.hbm [shape: f32[2,2,16,16], index: 0, kind: input, shape index: {}]
  %s1 = inlined_call_operand.hbm [shape: f32[2,7,16,16], index: 1, kind: input, shape index: {}]
  %s2 = inlined_call_operand.hbm [shape: f32[1,1], index: 2, kind: output, shape index: {}]
  %s3 = sld [smem:[#allocation0]]
  $region26: #{bs_loss.1} parent=0
    _
  %s5 = ssub.s32 1, %s3
  %s6 = scalar_select 0, %s5, %s3
  $region1: #{bs_loss.1} parent=0
    #allocation3 [shape = 'u8[32768]{0}', space=vmem, size = 0x8000, scoped, tag = 'input window, operand 0, single buffered']
    #allocation4 [shape = 's32[1]{0}', space=sflag, size = 0x4, scoped, tag = 'scoped memory for bs_loss.1']
    #allocation5 [shape = 's32[1]{0}', space=sflag, size = 0x4, scoped, tag = 'scoped memory for bs_loss.1']
    #allocation6 [shape = 'u8[114688]{0}', space=vmem, size = 0x1c000, scoped, tag = 'input window, operand 1, single buffered']
    #allocation7 [shape = 's32[1]{0}', space=sflag, size = 0x4, scoped, tag = 'scoped memory for bs_loss.1']
    #allocation8 [shape = 'u8[512]{0}', space=vmem, size = 0x400, scoped, tag = 'output window, operand 0, single buffered']
    %7 = vsyncpa [#allocation4], 0
    %8 = vsyncpa [#allocation7], 0
    %9 = vsyncpa [#allocation5], 0
    // Predicated region
    $region2: #{bs_loss.1} parent=1 // pred_check
      _
    $region3: #{bs_loss.1} parent=1 // pred_check_branch
      %11 = sbr.rel (0) target = $region5
    $region4: #{bs_loss.1} parent=1 // pred_region
      %s13 = ssub.s32 1024, 1024
      %14 = vsyncadd [#allocation4], %s13
      %s15 = sshll.u32 [#allocation3], 4
      %s16 = int_to_ptr.vmem [resolvable:$true] %s15
      %21 = dma.hbm_to_vmem [thread:$0]  %s0, 1024, %s16, [#allocation4], 128, 128, 8
    $region5: #{bs_loss.1} parent=1 // pred_fallthru
      _
    // Predicated region
    $region6: #{bs_loss.1} parent=1 // pred_check
      _
    $region7: #{bs_loss.1} parent=1 // pred_check_branch
      %23 = sbr.rel (0) target = $region9
    $region8: #{bs_loss.1} parent=1 // pred_region
      %s25 = ssub.s32 3584, 3584
      %26 = vsyncadd [#allocation7], %s25
      %s27 = sshll.u32 [#allocation6], 4
      %s28 = int_to_ptr.vmem [resolvable:$true] %s27
      %33 = dma.hbm_to_vmem [thread:$0]  %s1, 3584, %s28, [#allocation7], 128, 128, 8
    $region9: #{bs_loss.1} parent=1 // pred_fallthru
      _
    // Predicated region
    $region10: #{bs_loss.1} parent=1 // pred_check
      _
    $region11: #{bs_loss.1} parent=1 // pred_check_branch
      %35 = sbr.rel (0) target = $region13
    $region12: #{bs_loss.1} parent=1 // pred_region
      %36 = dma.done [#allocation4], 1024
    $region13: #{bs_loss.1} parent=1 // pred_fallthru
      _
    // Predicated region
    $region14: #{bs_loss.1} parent=1 // pred_check
      _
    $region15: #{bs_loss.1} parent=1 // pred_check_branch
      %38 = sbr.rel (0) target = $region17
    $region16: #{bs_loss.1} parent=1 // pred_region
      %39 = dma.done [#allocation7], 3584
    $region17: #{bs_loss.1} parent=1 // pred_fallthru
      _
    %vm40 = vcmask 146432
    %41 = vst.msk [vmem:[#allocation2] sm:$0xff] %vm40, 0.0
    %42 = vst.msk [vmem:[#allocation2 + $0x8] sm:$0xff] %vm40, 0.0
    %vm43 = vcmask 140288
    %44 = vst.msk [vmem:[#allocation2 + $0x10] sm:$0x3] %vm43, 0.0
    %45 = vst.msk [vmem:[#allocation2 + $0x18] sm:$0xff] %vm40, 0.0
    %46 = vst.msk [vmem:[#allocation2 + $0x20] sm:$0xff] %vm40, 0.0
    %47 = vst.msk [vmem:[#allocation2 + $0x28] sm:$0x3] %vm43, 0.0
    %48 = vst.msk [vmem:[#allocation2 + $0x30] sm:$0xff] %vm40, 0.0
    %49 = vst.msk [vmem:[#allocation2 + $0x38] sm:$0xff] %vm40, 0.0
    %50 = vst.msk [vmem:[#allocation2 + $0x40] sm:$0x3] %vm43, 0.0
    %51 = vst.msk [vmem:[#allocation2 + $0x48] sm:$0xff] %vm40, 0.0
    %52 = vst.msk [vmem:[#allocation2 + $0x50] sm:$0xff] %vm40, 0.0
    %53 = vst.msk [vmem:[#allocation2 + $0x58] sm:$0x3] %vm43, 0.0
    %v54 = vld [vmem:[#allocation3] sm:$0xff]
    %v55 = vld [vmem:[#allocation3 + $0x8] sm:$0xff]
    %v56 = vld [vmem:[#allocation3 + $0x10] sm:$0xff]
    %v57 = vld [vmem:[#allocation3 + $0x18] sm:$0xff]
    %v58 = vld [vmem:[#allocation3 + $0x20] sm:$0xff]
    %v59 = vld [vmem:[#allocation3 + $0x28] sm:$0xff]
    %v60 = vld [vmem:[#allocation3 + $0x30] sm:$0xff]
    %v61 = vld [vmem:[#allocation3 + $0x38] sm:$0xff]
    %70 = vrot.lane.b32.xlu0 %v54, 1
    %v71 = vpop.permute.xlu0 %70
    %72 = vrot.lane.b32.xlu0 %v55, 1
    %v73 = vpop.permute.xlu0 %72
    %74 = vrot.lane.b32.xlu0 %v56, 1
    %v75 = vpop.permute.xlu0 %74
    %76 = vrot.lane.b32.xlu0 %v57, 1
    %v77 = vpop.permute.xlu0 %76
    %78 = vrot.lane.b32.xlu0 %v58, 1
    %v79 = vpop.permute.xlu0 %78
    %80 = vrot.lane.b32.xlu0 %v59, 1
    %v81 = vpop.permute.xlu0 %80
    %82 = vrot.lane.b32.xlu0 %v60, 1
    %v83 = vpop.permute.xlu0 %82
    %84 = vrot.lane.b32.xlu0 %v61, 1
    %v85 = vpop.permute.xlu0 %84
    %vm94 = vcmask 138248
    %95 = vst.msk [vmem:[#allocation2 + $0x1] sm:$0xff] %vm94, %v71
    %96 = vst.msk [vmem:[#allocation2 + $0x9] sm:$0xff] %vm94, %v73
    %97 = vst.msk [vmem:[#allocation2 + $0x19] sm:$0xff] %vm94, %v75
    %98 = vst.msk [vmem:[#allocation2 + $0x21] sm:$0xff] %vm94, %v77
    %99 = vst.msk [vmem:[#allocation2 + $0x31] sm:$0xff] %vm94, %v79
    %100 = vst.msk [vmem:[#allocation2 + $0x39] sm:$0xff] %vm94, %v81
    %101 = vst.msk [vmem:[#allocation2 + $0x49] sm:$0xff] %vm94, %v83
    %102 = vst.msk [vmem:[#allocation2 + $0x51] sm:$0xff] %vm94, %v85
    %v103 = vld [vmem:[#allocation6] sm:$0xff]
    %v104 = vld [vmem:[#allocation6 + $0x8] sm:$0xff]
    %v105 = vld [vmem:[#allocation6 + $0x70] sm:$0xff]
    %v106 = vld [vmem:[#allocation6 + $0x78] sm:$0xff]
    %v107 = vld [vmem:[#allocation2] sm:$0xff]
    %v108 = vld [vmem:[#allocation2 + $0x8] sm:$0xff]
    %v109 = vld [vmem:[#allocation2 + $0x30] sm:$0xff]
    %v110 = vld [vmem:[#allocation2 + $0x38] sm:$0xff]
    %115 = vrot.lane.b32.xlu0 %v103, 1
    %v116 = vpop.permute.xlu0 %115
    %117 = vrot.lane.b32.xlu0 %v104, 1
    %v118 = vpop.permute.xlu0 %117
    %119 = vrot.lane.b32.xlu0 %v105, 1
    %v120 = vpop.permute.xlu0 %119
    %121 = vrot.lane.b32.xlu0 %v106, 1
    %v122 = vpop.permute.xlu0 %121
    %v127 = vmul.f32 %v107, %v116
    %v128 = vmul.f32 %v108, %v118
    %v129 = vmul.f32 %v109, %v120
    %v130 = vmul.f32 %v110, %v122
    %v131 = vadd.f32 %v127, 0.0
    %v132 = vadd.f32 %v128, 0.0
    %v133 = vadd.f32 %v129, 0.0
    %v134 = vadd.f32 %v130, 0.0
    %s135 = scalar_lea.vmem [#allocation2], 24
    %v136 = vld [vmem:[%s135] sm:$0xff]
    %v137 = vld [vmem:[%s135 + $0x8] sm:$0xff]
    %v138 = vld [vmem:[%s135 + $0x30] sm:$0xff]
    %v139 = vld [vmem:[%s135 + $0x38] sm:$0xff]
    %v140 = vmul.f32 %v136, %v116
    %v141 = vmul.f32 %v137, %v118
    %v142 = vmul.f32 %v138, %v120
    %v143 = vmul.f32 %v139, %v122
    %v144 = vadd.f32 %v140, 0.0
    %v145 = vadd.f32 %v141, 0.0
    %v146 = vadd.f32 %v142, 0.0
    %v147 = vadd.f32 %v143, 0.0
    %s148 = scalar_lea.vmem [#allocation6], 16
    %v149 = vld [vmem:[%s148] sm:$0xff]
    %v150 = vld [vmem:[%s148 + $0x8] sm:$0xff]
    %v151 = vld [vmem:[%s148 + $0x70] sm:$0xff]
    %v152 = vld [vmem:[%s148 + $0x78] sm:$0xff]
    %157 = vrot.lane.b32.xlu0 %v149, 2
    %v158 = vpop.permute.xlu0 %157
    %159 = vrot.lane.b32.xlu0 %v150, 2
    %v160 = vpop.permute.xlu0 %159
    %161 = vrot.lane.b32.xlu0 %v151, 2
    %v162 = vpop.permute.xlu0 %161
    %163 = vrot.lane.b32.xlu0 %v152, 2
    %v164 = vpop.permute.xlu0 %163
    %v169 = vmul.f32 %v107, %v158
    %v170 = vmul.f32 %v108, %v160
    %v171 = vmul.f32 %v109, %v162
    %v172 = vmul.f32 %v110, %v164
    %177 = vrot.lane.b32.xlu0 %v169, 127
    %v178 = vpop.permute.xlu0 %177
    %179 = vrot.lane.b32.xlu0 %v170, 127
    %v180 = vpop.permute.xlu0 %179
    %181 = vrot.lane.b32.xlu0 %v171, 127
    %v182 = vpop.permute.xlu0 %181
    %183 = vrot.lane.b32.xlu0 %v172, 127
    %v184 = vpop.permute.xlu0 %183
    %v189 = vadd.f32 %v131, %v178
    %v190 = vadd.f32 %v132, %v180
    %v191 = vadd.f32 %v133, %v182
    %v192 = vadd.f32 %v134, %v184
    %v193 = vmul.f32 %v136, %v158
    %v194 = vmul.f32 %v137, %v160
    %v195 = vmul.f32 %v138, %v162
    %v196 = vmul.f32 %v139, %v164
    %201 = vrot.lane.b32.xlu0 %v193, 127
    %v202 = vpop.permute.xlu0 %201
    %203 = vrot.lane.b32.xlu0 %v194, 127
    %v204 = vpop.permute.xlu0 %203
    %205 = vrot.lane.b32.xlu0 %v195, 127
    %v206 = vpop.permute.xlu0 %205
    %207 = vrot.lane.b32.xlu0 %v196, 127
    %v208 = vpop.permute.xlu0 %207
    %v213 = vadd.f32 %v144, %v202
    %v214 = vadd.f32 %v145, %v204
    %v215 = vadd.f32 %v146, %v206
    %v216 = vadd.f32 %v147, %v208
    %s217 = scalar_lea.vmem [#allocation6], 32
    %v218 = vld [vmem:[%s217] sm:$0xff]
    %v219 = vld [vmem:[%s217 + $0x8] sm:$0xff]
    %v220 = vld [vmem:[%s217 + $0x70] sm:$0xff]
    %v221 = vld [vmem:[%s217 + $0x78] sm:$0xff]
    %v222 = vld [vmem:[#allocation2 + $0x1] sm:$0xff]
    %v223 = vld [vmem:[#allocation2 + $0x9] sm:$0xff]
    %v224 = vld [vmem:[#allocation2 + $0x31] sm:$0xff]
    %v225 = vld [vmem:[#allocation2 + $0x39] sm:$0xff]
    %v226 = vmul.f32 %v222, %v218
    %v227 = vmul.f32 %v223, %v219
    %v228 = vmul.f32 %v224, %v220
    %v229 = vmul.f32 %v225, %v221
    %234 = vrot.lane.b32.xlu0 %v226, 1
    %v235 = vpop.permute.xlu0 %234
    %236 = vrot.lane.b32.xlu0 %v227, 1
    %v237 = vpop.permute.xlu0 %236
    %238 = vrot.lane.b32.xlu0 %v228, 1
    %v239 = vpop.permute.xlu0 %238
    %240 = vrot.lane.b32.xlu0 %v229, 1
    %v241 = vpop.permute.xlu0 %240
    %v246 = vadd.f32 %v189, %v235
    %v247 = vadd.f32 %v190, %v237
    %v248 = vadd.f32 %v191, %v239
    %v249 = vadd.f32 %v192, %v241
    %v250 = vld [vmem:[%s135 + $0x1] sm:$0xff]
    %v251 = vld [vmem:[%s135 + $0x9] sm:$0xff]
    %v252 = vld [vmem:[%s135 + $0x31] sm:$0xff]
    %v253 = vld [vmem:[%s135 + $0x39] sm:$0xff]
    %v254 = vmul.f32 %v250, %v218
    %v255 = vmul.f32 %v251, %v219
    %v256 = vmul.f32 %v252, %v220
    %v257 = vmul.f32 %v253, %v221
    %262 = vrot.lane.b32.xlu0 %v254, 1
    %v263 = vpop.permute.xlu0 %262
    %264 = vrot.lane.b32.xlu0 %v255, 1
    %v265 = vpop.permute.xlu0 %264
    %266 = vrot.lane.b32.xlu0 %v256, 1
    %v267 = vpop.permute.xlu0 %266
    %268 = vrot.lane.b32.xlu0 %v257, 1
    %v269 = vpop.permute.xlu0 %268
    %v274 = vadd.f32 %v213, %v263
    %v275 = vadd.f32 %v214, %v265
    %v276 = vadd.f32 %v215, %v267
    %v277 = vadd.f32 %v216, %v269
    %s278 = scalar_lea.vmem [#allocation6], 48
    %v279 = vld [vmem:[%s278] sm:$0xff]
    %v280 = vld [vmem:[%s278 + $0x8] sm:$0xff]
    %v281 = vld [vmem:[%s278 + $0x70] sm:$0xff]
    %v282 = vld [vmem:[%s278 + $0x78] sm:$0xff]
    %287 = vrot.lane.b32.xlu0 %v279, 1
    %v288 = vpop.permute.xlu0 %287
    %289 = vrot.lane.b32.xlu0 %v280, 1
    %v290 = vpop.permute.xlu0 %289
    %291 = vrot.lane.b32.xlu0 %v281, 1
    %v292 = vpop.permute.xlu0 %291
    %293 = vrot.lane.b32.xlu0 %v282, 1
    %v294 = vpop.permute.xlu0 %293
    %v299 = vmul.f32 %v222, %v288
    %v300 = vmul.f32 %v223, %v290
    %v301 = vmul.f32 %v224, %v292
    %v302 = vmul.f32 %v225, %v294
    %v303 = vadd.f32 %v246, %v299
    %v304 = vadd.f32 %v247, %v300
    %v305 = vadd.f32 %v248, %v301
    %v306 = vadd.f32 %v249, %v302
    %v307 = vmul.f32 %v250, %v288
    %v308 = vmul.f32 %v251, %v290
    %v309 = vmul.f32 %v252, %v292
    %v310 = vmul.f32 %v253, %v294
    %v311 = vadd.f32 %v274, %v307
    %v312 = vadd.f32 %v275, %v308
    %v313 = vadd.f32 %v276, %v309
    %v314 = vadd.f32 %v277, %v310
    %s315 = scalar_lea.vmem [#allocation6], 64
    %v316 = vld [vmem:[%s315] sm:$0xff]
    %v317 = vld [vmem:[%s315 + $0x8] sm:$0xff]
    %v318 = vld [vmem:[%s315 + $0x70] sm:$0xff]
    %v319 = vld [vmem:[%s315 + $0x78] sm:$0xff]
    %324 = vrot.lane.b32.xlu0 %v316, 2
    %v325 = vpop.permute.xlu0 %324
    %326 = vrot.lane.b32.xlu0 %v317, 2
    %v327 = vpop.permute.xlu0 %326
    %328 = vrot.lane.b32.xlu0 %v318, 2
    %v329 = vpop.permute.xlu0 %328
    %330 = vrot.lane.b32.xlu0 %v319, 2
    %v331 = vpop.permute.xlu0 %330
    %v336 = vmul.f32 %v222, %v325
    %v337 = vmul.f32 %v223, %v327
    %v338 = vmul.f32 %v224, %v329
    %v339 = vmul.f32 %v225, %v331
    %344 = vrot.lane.b32.xlu0 %v336, 127
    %v345 = vpop.permute.xlu0 %344
    %346 = vrot.lane.b32.xlu0 %v337, 127
    %v347 = vpop.permute.xlu0 %346
    %348 = vrot.lane.b32.xlu0 %v338, 127
    %v349 = vpop.permute.xlu0 %348
    %350 = vrot.lane.b32.xlu0 %v339, 127
    %v351 = vpop.permute.xlu0 %350
    %v356 = vadd.f32 %v303, %v345
    %v357 = vadd.f32 %v304, %v347
    %v358 = vadd.f32 %v305, %v349
    %v359 = vadd.f32 %v306, %v351
    %v360 = vmul.f32 %v250, %v325
    %v361 = vmul.f32 %v251, %v327
    %v362 = vmul.f32 %v252, %v329
    %v363 = vmul.f32 %v253, %v331
    %368 = vrot.lane.b32.xlu0 %v360, 127
    %v369 = vpop.permute.xlu0 %368
    %370 = vrot.lane.b32.xlu0 %v361, 127
    %v371 = vpop.permute.xlu0 %370
    %372 = vrot.lane.b32.xlu0 %v362, 127
    %v373 = vpop.permute.xlu0 %372
    %374 = vrot.lane.b32.xlu0 %v363, 127
    %v375 = vpop.permute.xlu0 %374
    %v380 = vadd.f32 %v311, %v369
    %v381 = vadd.f32 %v312, %v371
    %v382 = vadd.f32 %v313, %v373
    %v383 = vadd.f32 %v314, %v375
    %s384 = scalar_lea.vmem [#allocation6], 80
    %v385 = vld [vmem:[%s384] sm:$0xff]
    %v386 = vld [vmem:[%s384 + $0x8] sm:$0xff]
    %v387 = vld [vmem:[%s384 + $0x70] sm:$0xff]
    %v388 = vld [vmem:[%s384 + $0x78] sm:$0xff]
    %v389 = vld [vmem:[#allocation2 + $0x2] sm:$0xff]
    %v390 = vld [vmem:[#allocation2 + $0xa] sm:$0xff]
    %v391 = vld [vmem:[#allocation2 + $0x32] sm:$0xff]
    %v392 = vld [vmem:[#allocation2 + $0x3a] sm:$0xff]
    %v393 = vmul.f32 %v389, %v385
    %v394 = vmul.f32 %v390, %v386
    %v395 = vmul.f32 %v391, %v387
    %v396 = vmul.f32 %v392, %v388
    %401 = vrot.lane.b32.xlu0 %v393, 1
    %v402 = vpop.permute.xlu0 %401
    %403 = vrot.lane.b32.xlu0 %v394, 1
    %v404 = vpop.permute.xlu0 %403
    %405 = vrot.lane.b32.xlu0 %v395, 1
    %v406 = vpop.permute.xlu0 %405
    %407 = vrot.lane.b32.xlu0 %v396, 1
    %v408 = vpop.permute.xlu0 %407
    %v413 = vadd.f32 %v356, %v402
    %v414 = vadd.f32 %v357, %v404
    %v415 = vadd.f32 %v358, %v406
    %v416 = vadd.f32 %v359, %v408
    %v417 = vld [vmem:[%s135 + $0x2] sm:$0xff]
    %v418 = vld [vmem:[%s135 + $0xa] sm:$0xff]
    %v419 = vld [vmem:[%s135 + $0x32] sm:$0xff]
    %v420 = vld [vmem:[%s135 + $0x3a] sm:$0xff]
    %v421 = vmul.f32 %v417, %v385
    %v422 = vmul.f32 %v418, %v386
    %v423 = vmul.f32 %v419, %v387
    %v424 = vmul.f32 %v420, %v388
    %429 = vrot.lane.b32.xlu0 %v421, 1
    %v430 = vpop.permute.xlu0 %429
    %431 = vrot.lane.b32.xlu0 %v422, 1
    %v432 = vpop.permute.xlu0 %431
    %433 = vrot.lane.b32.xlu0 %v423, 1
    %v434 = vpop.permute.xlu0 %433
    %435 = vrot.lane.b32.xlu0 %v424, 1
    %v436 = vpop.permute.xlu0 %435
    %v441 = vadd.f32 %v380, %v430
    %v442 = vadd.f32 %v381, %v432
    %v443 = vadd.f32 %v382, %v434
    %v444 = vadd.f32 %v383, %v436
    %s445 = scalar_lea.vmem [#allocation6], 96
    %v446 = vld [vmem:[%s445] sm:$0xff]
    %v447 = vld [vmem:[%s445 + $0x8] sm:$0xff]
    %v448 = vld [vmem:[%s445 + $0x70] sm:$0xff]
    %v449 = vld [vmem:[%s445 + $0x78] sm:$0xff]
    %454 = vrot.lane.b32.xlu0 %v446, 1
    %v455 = vpop.permute.xlu0 %454
    %456 = vrot.lane.b32.xlu0 %v447, 1
    %v457 = vpop.permute.xlu0 %456
    %458 = vrot.lane.b32.xlu0 %v448, 1
    %v459 = vpop.permute.xlu0 %458
    %460 = vrot.lane.b32.xlu0 %v449, 1
    %v461 = vpop.permute.xlu0 %460
    %v466 = vmul.f32 %v389, %v455
    %v467 = vmul.f32 %v390, %v457
    %v468 = vmul.f32 %v391, %v459
    %v469 = vmul.f32 %v392, %v461
    %v470 = vadd.f32 %v413, %v466
    %v471 = vadd.f32 %v414, %v467
    %v472 = vadd.f32 %v415, %v468
    %v473 = vadd.f32 %v416, %v469
    %v474 = vmul.f32 %v417, %v455
    %v475 = vmul.f32 %v418, %v457
    %v476 = vmul.f32 %v419, %v459
    %v477 = vmul.f32 %v420, %v461
    %v478 = vadd.f32 %v441, %v474
    %v479 = vadd.f32 %v442, %v475
    %v480 = vadd.f32 %v443, %v476
    %v481 = vadd.f32 %v444, %v477
    %v482 = vand.u32 2147483647, %v470
    %v483 = vand.u32 2147483647, %v471
    %v484 = vand.u32 2147483647, %v472
    %v485 = vand.u32 2147483647, %v473
    %490 = vrot.lane.b32.xlu0 %v482, 126
    %v491 = vpop.permute.xlu0 %490
    %492 = vrot.lane.b32.xlu0 %v483, 126
    %v493 = vpop.permute.xlu0 %492
    %494 = vrot.lane.b32.xlu0 %v484, 126
    %v495 = vpop.permute.xlu0 %494
    %496 = vrot.lane.b32.xlu0 %v485, 126
    %v497 = vpop.permute.xlu0 %496
    %vm502 = vcmask 113664
    %v503 = vsel %vm502, %v491, 0.0
    %v504 = vsel %vm502, %v493, 0.0
    %v505 = vadd.f32 %v503, %v504
    %v506 = vsel %vm502, %v495, 0.0
    %v507 = vadd.f32 %v505, %v506
    %v508 = vsel %vm502, %v497, 0.0
    %v509 = vadd.f32 %v507, %v508
    %510 = vadd.xlane.f32.xlu0 %v509
    %v511 = vpop.xlane.xlu0 %510
    %v512 = vrot.slane %v511, 4
    %v513 = vadd.f32 %v511, %v512
    %v514 = vrot.slane %v513, 2
    %v515 = vadd.f32 %v513, %v514
    %v516 = vrot.slane %v515, 1
    %v517 = vadd.f32 %v515, %v516
    %s518 = vtos %v517
    %v519 = vand.u32 2147483647, %v478
    %v520 = vand.u32 2147483647, %v479
    %v521 = vand.u32 2147483647, %v480
    %v522 = vand.u32 2147483647, %v481
    %vm527 = vcmask 1046528
    %v528 = vrot.slane %v519, 1
    %v529 = vrot.slane %v520, 1
    %v530 = vsel %vm527, %v528, %v529
    %v531 = vrot.slane %v521, 1
    %v532 = vrot.slane %v522, 1
    %v533 = vsel %vm527, %v531, %v532
    %534 = vrot.lane.b32.xlu0 %v530, 127
    %v535 = vpop.permute.xlu0 %534
    %536 = vrot.lane.b32.xlu0 %v529, 127
    %v537 = vpop.permute.xlu0 %536
    %538 = vrot.lane.b32.xlu0 %v533, 127
    %v539 = vpop.permute.xlu0 %538
    %540 = vrot.lane.b32.xlu0 %v532, 127
    %v541 = vpop.permute.xlu0 %540
    %vm546 = vcmask 130048
    %v547 = vsel %vm546, %v535, 0.0
    %vm548 = vcmask 128000
    %v549 = vsel %vm548, %v537, 0.0
    %v550 = vadd.f32 %v547, %v549
    %v551 = vsel %vm546, %v539, 0.0
    %v552 = vadd.f32 %v550, %v551
    %v553 = vsel %vm548, %v541, 0.0
    %v554 = vadd.f32 %v552, %v553
    %555 = vadd.xlane.f32.xlu0 %v554
    %v556 = vpop.xlane.xlu0 %555
    %v557 = vrot.slane %v556, 4
    %v558 = vadd.f32 %v556, %v557
    %v559 = vrot.slane %v558, 2
    %v560 = vadd.f32 %v558, %v559
    %v561 = vrot.slane %v560, 1
    %v562 = vadd.f32 %v560, %v561
    %s563 = vtos %v562
    %s564 = sadd.f32 %s518, %s563
    %v565 = vstv %s564
    %vm566 = vcmask 0
    %567 = vst.msk [vmem:[#allocation8] sm:$0x1] %vm566, %v565
    // Predicated region
    $region18: #{bs_loss.1} parent=1 // pred_check
      _
    $region19: #{bs_loss.1} parent=1 // pred_check_branch
      %569 = sbr.rel (0) target = $region21
    $region20: #{bs_loss.1} parent=1 // pred_region
      %s571 = ssub.s32 16, 16
      %572 = vsyncadd [#allocation5], %s571
      %s574 = sshll.u32 [#allocation8], 4
      %s575 = int_to_ptr.vmem [resolvable:$true] %s574
      %577 = dma.vmem_to_hbm [thread:$0]  %s575, 16, %s2, [#allocation5]
    $region21: #{bs_loss.1} parent=1 // pred_fallthru
      _
    // Predicated region
    $region22: #{bs_loss.1} parent=1 // pred_check
      _
    $region23: #{bs_loss.1} parent=1 // pred_check_branch
      %579 = sbr.rel (0) target = $region25
    $region24: #{bs_loss.1} parent=1 // pred_region
      %580 = dma.done [#allocation5], 16
    $region25: #{bs_loss.1} parent=1 // pred_fallthru
      _
    %581 = vsyncpa [#allocation4], 1
    %582 = vsyncpa [#allocation7], 1
    %583 = vsyncpa [#allocation5], 1

</llo_original>
